<compile_context>
chip_gen: v7x
topology: tpu7x:2x2x1
jax: 0.10.0
libtpu: 0.0.40
codegen_flags: <defaults>
</compile_context>

<pallas_src>
import numpy as np
import jax
import jax.numpy as jnp
from jax.experimental import pallas as pl
from jax.experimental.pallas import tpu as pltpu

# ---- problem geometry (from the torch module; x6: (1,1,5,5)) ---------------
N, C_IN, H_IN, W_IN = 1, 1, 5, 5
C_OUT = 62
KH, KW = 3, 1
STRIDE_H, STRIDE_W = 3, 3
PAD_H, PAD_W = 1, 0
OUT_PAD_H, OUT_PAD_W = 1, 0
DIL_H, DIL_W = 2, 4                       # groups=(1,1) -> treated as groups=1

H_OUT = (H_IN - 1) * STRIDE_H - 2 * PAD_H + DIL_H * (KH - 1) + OUT_PAD_H + 1   # 16
W_OUT = (W_IN - 1) * STRIDE_W - 2 * PAD_W + DIL_W * (KW - 1) + OUT_PAD_W + 1   # 13

P_IN = H_IN * W_IN            # 25
QTOT = H_OUT * W_OUT          # 208   q = oh * W_OUT + ow  (contiguous -> free reshape)
K_PAD = 8                     # contraction dim padded to one sublane group
BIAS_COL = KH                 # col/row 3 carries the bias (via all-ones xs row)
C_PAD = 64                    # sublane-dense lhs rows (62 -> 64)


def _routing_tables():
    """Constant gather index/mask: for output pixel q = oh*13+ow and kernel tap
    kh, which input pixel p = ih*5+iw feeds it (mask=0 if none)."""
    gidx = np.zeros((KH, QTOT), np.int32)
    gmask = np.zeros((KH, QTOT), np.float32)
    for kh in range(KH):
        for ih in range(H_IN):
            oh = ih * STRIDE_H - PAD_H + kh * DIL_H
            if not (0 <= oh < H_OUT):
                continue
            for iw in range(W_IN):
                ow = iw * STRIDE_W - PAD_W          # kw == 0 only (KW == 1)
                if 0 <= ow < W_OUT:
                    q = oh * W_OUT + ow
                    gidx[kh, q] = ih * W_IN + iw
                    gmask[kh, q] = 1.0
    return jnp.asarray(gidx), jnp.asarray(gmask)


GIDX, GMASK = _routing_tables()
# rows 0..2 filled per call with routed x; row 3 = bias row of ones; rows 4..7 zero
XS_BASE = jnp.zeros((K_PAD, QTOT), jnp.float32).at[BIAS_COL, :].set(1.0)


# ---- Pallas kernel ----------------------------------------------------------
def conv_t_leaky_kernel(w_ref, xs_ref, o_ref):
    # w_ref : (C_PAD, K_PAD)  f32   cols 0..2 = w[:,kh], col 3 = bias
    # xs_ref: (K_PAD, QTOT)   f32   rows 0..2 = routed x, row 3 = ones
    # o_ref : (C_OUT, QTOT)   f32
    v = jnp.dot(w_ref[...], xs_ref[...],
                preferred_element_type=jnp.float32)        # single tiny MXU matmul
    v = v[:C_OUT, :]
    o_ref[...] = jnp.maximum(v, v * 0.1)                   # leaky-relu(0.1)


def pack_params(weight, bias):
    """One-time ('module init') parameter repacking: (1,62,3,1) weight + (62,)
    bias  ->  (64, 8) padded lhs with the bias folded into column BIAS_COL."""
    w_pad = jnp.zeros((C_PAD, K_PAD), jnp.float32)
    w_pad = w_pad.at[:C_OUT, :KH].set(weight[0, :, :, 0].astype(jnp.float32))
    w_pad = w_pad.at[:C_OUT, BIAS_COL].set(bias.astype(jnp.float32))
    return w_pad


@jax.jit
def model_forward(x_nchw, w_pad):
    """x_nchw: (1,1,5,5); w_pad: prepacked (64,8). Returns (1,62,16,13) f32."""
    x_flat = x_nchw.reshape(P_IN).astype(jnp.float32)
    routed = x_flat[GIDX] * GMASK                          # (KH, QTOT) tiny fused gather
    xs = XS_BASE.at[:KH, :].set(routed)                    # (K_PAD, QTOT)

    out2d = pl.pallas_call(
        conv_t_leaky_kernel,
        out_shape=jax.ShapeDtypeStruct((C_OUT, QTOT), jnp.float32),
        in_specs=[
            pl.BlockSpec(memory_space=pltpu.MemorySpace.VMEM),
            pl.BlockSpec(memory_space=pltpu.MemorySpace.VMEM),
        ],
        out_specs=pl.BlockSpec(memory_space=pltpu.MemorySpace.VMEM),
    )(w_pad, xs)

    # q = oh*W_OUT + ow is contiguous -> layout-preserving reshape (no slice pass)
    return out2d.reshape(1, C_OUT, H_OUT, W_OUT)


# ---- reference (pure numpy) -------------------------------------------------
def reference_forward(x_nchw, weight, bias):
    xr = np.asarray(x_nchw, np.float32)[0, 0]
    Wr = np.asarray(weight, np.float32)[0]          # (C_OUT, KH, KW)
    br = np.asarray(bias, np.float32)
    out = np.broadcast_to(br[:, None, None], (C_OUT, H_OUT, W_OUT)).copy()
    for ih in range(H_IN):
        for iw in range(W_IN):
            for kh in range(KH):
                oh = ih * STRIDE_H - PAD_H + kh * DIL_H
                ow = iw * STRIDE_W - PAD_W
                if 0 <= oh < H_OUT and 0 <= ow < W_OUT:
                    out[:, oh, ow] += xr[ih, iw] * Wr[:, kh, 0]
    out = np.where(out > 0, out, out * 0.1)
    return out[None]


if __name__ == "__main__":
    key = jax.random.PRNGKey(0)
    kx, kw, kb = jax.random.split(key, 3)

    x6 = jax.random.normal(kx, (N, C_IN, H_IN, W_IN), dtype=jnp.float32)
    # deterministic parameter init (shapes match nn.ConvTranspose2d(1, 62, (3,1)))
    fan_in = C_IN * KH * KW
    bound = 1.0 / np.sqrt(fan_in)
    weight = jax.random.uniform(kw, (C_IN, C_OUT, KH, KW), jnp.float32, -bound, bound)
    bias = jax.random.uniform(kb, (C_OUT,), jnp.float32, -bound, bound)

    w_pad = pack_params(weight, bias)          # hoisted out of the forward path

    out = model_forward(x6, w_pad)
    out = jax.block_until_ready(out)

    ref = reference_forward(x6, weight, bias)
    assert out.shape == (1, C_OUT, H_OUT, W_OUT), out.shape
    np.testing.assert_allclose(np.asarray(out), ref, rtol=1e-5, atol=1e-5)
    print("KERNEL_OK")
</pallas_src>

<mosaic_0001>
module attributes {stable_mosaic.version = 11 : i64} {
  func.func @conv_t_leaky_kernel(%arg0: memref<64x8xf32, #tpu.memory_space<vmem>>, %arg1: memref<8x208xf32, #tpu.memory_space<vmem>>, %arg2: memref<62x208xf32, #tpu.memory_space<vmem>>) attributes {dimension_semantics = [], scalar_prefetch = 0 : i64, scratch_operands = 0 : i64, tpu.core_type = #tpu.core_type<tc>} {
    %c0 = arith.constant 0 : index
    %c0_0 = arith.constant 0 : index
    %0 = vector.load %arg0[%c0, %c0_0] : memref<64x8xf32, #tpu.memory_space<vmem>>, vector<64x8xf32>
    %c0_1 = arith.constant 0 : index
    %c0_2 = arith.constant 0 : index
    %1 = vector.load %arg1[%c0_1, %c0_2] : memref<8x208xf32, #tpu.memory_space<vmem>>, vector<8x208xf32>
    %cst = arith.constant dense<0.000000e+00> : vector<64x208xf32>
    %2 = tpu.matmul %0, %1, %cst {dimension_numbers = #tpu.dot_dimension_numbers<[1], [0], [0], [1], [0, 0, 1, 1], [], []>} : vector<64x8xf32>, vector<8x208xf32>, vector<64x208xf32> -> vector<64x208xf32>
    %3 = vector.extract_strided_slice %2 {offsets = [0, 0], sizes = [62, 208], strides = [1, 1]} : vector<64x208xf32> to vector<62x208xf32>
    %cst_3 = arith.constant 1.000000e-01 : f32
    %4 = vector.broadcast %cst_3 : f32 to vector<62x208xf32>
    %5 = arith.mulf %3, %4 : vector<62x208xf32>
    %6 = arith.maximumf %3, %5 : vector<62x208xf32>
    %c0_4 = arith.constant 0 : index
    %c0_5 = arith.constant 0 : index
    %7 = vector.load %arg2[%c0_4, %c0_5] : memref<62x208xf32, #tpu.memory_space<vmem>>, vector<62x208xf32>
    tpu.vector_store %arg2[%c0_4, %c0_5], %6 {strides = array<i32>} : memref<62x208xf32, #tpu.memory_space<vmem>>, vector<62x208xf32>,
    return
  }
}

</mosaic_0001>

<llo_original>
// kernel: mul.0
$region0: #{mul.0}
  #allocation0 [shape = 's32[1]{0}', space=sflag, size = 0x4, scoped, tag = 'scoped memory for mul.0']
  %s0 = inlined_call_operand.vmem [shape: f32[624], index: 0, kind: input, shape index: {}]
  %s1 = inlined_call_operand.vmem [shape: f32[624], index: 1, kind: input, shape index: {}]
  %s2 = inlined_call_operand.vmem [shape: f32[624], index: 2, kind: output, shape index: {}]
  %v3 = vld [vmem:[%s0] sm:$0x1f]
  %v4 = vld [vmem:[%s1] sm:$0x1f]
  %5 = xla_tuple %v3, %v4
  %6 = xla_tuple %5
  %v7 = vmul.f32 %v3, %v4
  %8 = xla_tuple %v7
  %9 = vst [vmem:[%s2] sm:$0xff] %v7

// kernel: model_forward.1
$region0: #{model_forward.1}
  #allocation0 [shape = 'u32[]', space=smem, size = 0x4, offset = 0x4, fixed_abs, tag = 'smem constant byte address 0x4 - core index']
  #allocation1 [shape = 'u32[144,128]{1,0:T(1,128)}', space=vmem, size = 0x12000, scoped, tag = 'internal scratch']
  %s0 = inlined_call_operand.vmem [shape: f32[64,8], index: 0, kind: input, shape index: {}]
  %s1 = inlined_call_operand.vmem [shape: f32[8,208], index: 1, kind: input, shape index: {}]
  %s2 = inlined_call_operand.vmem [shape: f32[62,208], index: 2, kind: output, shape index: {}]
  %s3 = sld [smem:[#allocation0]]
  $region18: #{model_forward.1} parent=0
    _
  %s5 = ssub.s32 1, %s3
  %s6 = scalar_select 0, %s5, %s3
  // Predicated region
  $region2: #{model_forward.1} parent=0 // pred_check
    _
  $region3: #{model_forward.1} parent=0 // pred_check_branch
    %8 = sbr.rel (0) target = $region5
  $region4: #{model_forward.1} parent=0 // pred_region
    _
  $region5: #{model_forward.1} parent=0 // pred_fallthru
    _
  // Predicated region
  $region6: #{model_forward.1} parent=0 // pred_check
    _
  $region7: #{model_forward.1} parent=0 // pred_check_branch
    %10 = sbr.rel (0) target = $region9
  $region8: #{model_forward.1} parent=0 // pred_region
    _
  $region9: #{model_forward.1} parent=0 // pred_fallthru
    _
  %v11 = vld [vmem:[%s0] sm:$0xff]
  %v12 = vld [vmem:[%s0 + $0x8] sm:$0xff]
  %v13 = vld [vmem:[%s0 + $0x10] sm:$0xff]
  %v14 = vld [vmem:[%s0 + $0x18] sm:$0xff]
  %v15 = vld [vmem:[%s0 + $0x20] sm:$0xff]
  %v16 = vld [vmem:[%s0 + $0x28] sm:$0xff]
  %v17 = vld [vmem:[%s0 + $0x30] sm:$0xff]
  %v18 = vld [vmem:[%s0 + $0x38] sm:$0xff]
  %v19 = vld [vmem:[%s1] sm:$0xff]
  %v20 = vld [vmem:[%s1 + $0x8] sm:$0xff]
  %vm21 = vcmask 64512
  %v23 = vsel %vm21, %v11, 0
  %v26 = vsel %vm21, %v12, 0
  %v29 = vsel %vm21, %v13, 0
  %v32 = vsel %vm21, %v14, 0
  %v35 = vsel %vm21, %v15, 0
  %v38 = vsel %vm21, %v16, 0
  %v41 = vsel %vm21, %v17, 0
  %v44 = vsel %vm21, %v18, 0
  %46 = vmatprep.subr.mxu0 %v20
  %47 = vmatpush1.msra.mxu0 %v19
  %48 = vmatprep.subr.mxu0 0.0
  %49 = vmatpush1.msra.mxu0 0.0
  %50 = vmatprep.subr.mxu0 0.0
  %51 = vmatpush1.msra.mxu0 0.0
  %52 = vmatprep.subr.mxu0 0.0
  %53 = vmatpush1.msra.mxu0 0.0
  %54 = vmatprep.subr.mxu0 0.0
  %55 = vmatpush1.msra.mxu0 0.0
  %56 = vmatprep.subr.mxu0 0.0
  %57 = vmatpush1.msra.mxu0 0.0
  %58 = vmatprep.subr.mxu0 0.0
  %59 = vmatpush1.msra.mxu0 0.0
  %60 = vmatprep.subr.mxu0 0.0
  %61 = vmatpush1.msra.mxu0 0.0
  %62 = vmatprep.subr.mxu0 0.0
  %63 = vmatpush1.msra.mxu0 0.0
  %64 = vmatprep.subr.mxu0 0.0
  %65 = vmatpush1.msra.mxu0 0.0
  %66 = vmatprep.subr.mxu0 0.0
  %67 = vmatpush1.msra.mxu0 0.0
  %68 = vmatprep.subr.mxu0 0.0
  %69 = vmatpush1.msra.mxu0 0.0
  %70 = vmatprep.subr.mxu0 0.0
  %71 = vmatpush1.msra.mxu0 0.0
  %72 = vmatprep.subr.mxu0 0.0
  %73 = vmatpush1.msra.mxu0 0.0
  %74 = vmatprep.subr.mxu0 0.0
  %75 = vmatpush1.msra.mxu0 0.0
  %76 = vmatprep.subr.mxu0 0.0
  %77 = vmatpush1.msra.mxu0 0.0
  %78 = vmatprep.subr.mxu0 0.0
  %79 = vmatpush1.msra.mxu0 0.0
  %80 = vmatprep.subr.mxu0 0.0
  %81 = vmatpush1.msra.mxu0 0.0
  %82 = vmatprep.subr.mxu0 0.0
  %83 = vmatpush1.msra.mxu0 0.0
  %84 = vmatprep.subr.mxu0 0.0
  %85 = vmatpush1.msra.mxu0 0.0
  %86 = vmatprep.subr.mxu0 0.0
  %87 = vmatpush1.msra.mxu0 0.0
  %88 = vmatprep.subr.mxu0 0.0
  %89 = vmatpush1.msra.mxu0 0.0
  %90 = vmatprep.subr.mxu0 0.0
  %91 = vmatpush1.msra.mxu0 0.0
  %92 = vmatprep.subr.mxu0 0.0
  %93 = vmatpush1.msra.mxu0 0.0
  %94 = vmatprep.subr.mxu0 0.0
  %95 = vmatpush1.msra.mxu0 0.0
  %96 = vmatprep.subr.mxu0 0.0
  %97 = vmatpush1.msra.mxu0 0.0
  %98 = vmatprep.subr.mxu0 0.0
  %99 = vmatpush1.msra.mxu0 0.0
  %100 = vmatprep.subr.mxu0 0.0
  %101 = vmatpush1.msra.mxu0 0.0
  %102 = vmatprep.subr.mxu0 0.0
  %103 = vmatpush1.msra.mxu0 0.0
  %104 = vmatprep.subr.mxu0 0.0
  %105 = vmatpush1.msra.mxu0 0.0
  %106 = vmatprep.subr.mxu0 0.0
  %107 = vmatpush1.msra.mxu0 0.0
  %108 = vmatprep.subr.mxu0 0.0
  %109 = vmatpush1.msra.mxu0 0.0
  %110 = vmatprep.mubr.f32.mxu0 0.0
  %111 = vmatmul.mubr.f32.gmra.mrb[0].mxu0 %v23
  %v112 = vpop.f32.mrb[0].mxu0
  %v113 = vadd.f32 0.0, %v112
  %v114 = vpop.f32.mrb[0].mxu0
  %v115 = vadd.f32 0.0, %v114
  %116 = vmatprep.mubr.f32.mxu0 0.0
  %117 = vmatmul.mubr.f32.gmra.mrb[0].mxu0 %v26
  %v118 = vpop.f32.mrb[0].mxu0
  %v119 = vadd.f32 0.0, %v118
  %v120 = vpop.f32.mrb[0].mxu0
  %v121 = vadd.f32 0.0, %v120
  %122 = vmatprep.mubr.f32.mxu0 0.0
  %123 = vmatmul.mubr.f32.gmra.mrb[0].mxu0 %v29
  %v124 = vpop.f32.mrb[0].mxu0
  %v125 = vadd.f32 0.0, %v124
  %v126 = vpop.f32.mrb[0].mxu0
  %v127 = vadd.f32 0.0, %v126
  %128 = vmatprep.mubr.f32.mxu0 0.0
  %129 = vmatmul.mubr.f32.gmra.mrb[0].mxu0 %v32
  %v130 = vpop.f32.mrb[0].mxu0
  %v131 = vadd.f32 0.0, %v130
  %v132 = vpop.f32.mrb[0].mxu0
  %v133 = vadd.f32 0.0, %v132
  %134 = vmatprep.mubr.f32.mxu0 0.0
  %135 = vmatmul.mubr.f32.gmra.mrb[0].mxu0 %v35
  %v136 = vpop.f32.mrb[0].mxu0
  %v137 = vadd.f32 0.0, %v136
  %v138 = vpop.f32.mrb[0].mxu0
  %v139 = vadd.f32 0.0, %v138
  %140 = vmatprep.mubr.f32.mxu0 0.0
  %141 = vmatmul.mubr.f32.gmra.mrb[0].mxu0 %v38
  %v142 = vpop.f32.mrb[0].mxu0
  %v143 = vadd.f32 0.0, %v142
  %v144 = vpop.f32.mrb[0].mxu0
  %v145 = vadd.f32 0.0, %v144
  %146 = vmatprep.mubr.f32.mxu0 0.0
  %147 = vmatmul.mubr.f32.gmra.mrb[0].mxu0 %v41
  %v148 = vpop.f32.mrb[0].mxu0
  %v149 = vadd.f32 0.0, %v148
  %v150 = vpop.f32.mrb[0].mxu0
  %v151 = vadd.f32 0.0, %v150
  %152 = vmatprep.mubr.f32.mxu0 0.0
  %153 = vmatmul.mubr.f32.gmra.mrb[0].mxu0 %v44
  %v154 = vpop.f32.mrb[0].mxu0
  %v155 = vadd.f32 0.0, %v154
  %v156 = vpop.f32.mrb[0].mxu0
  %v157 = vadd.f32 0.0, %v156
  %158 = vdwg.mxu0
  %v159 = vmul.f32 %v113, 0.1
  %v160 = vmul.f32 %v115, 0.1
  %v161 = vmul.f32 %v119, 0.1
  %v162 = vmul.f32 %v121, 0.1
  %v163 = vmul.f32 %v125, 0.1
  %v164 = vmul.f32 %v127, 0.1
  %v165 = vmul.f32 %v131, 0.1
  %v166 = vmul.f32 %v133, 0.1
  %v167 = vmul.f32 %v137, 0.1
  %v168 = vmul.f32 %v139, 0.1
  %v169 = vmul.f32 %v143, 0.1
  %v170 = vmul.f32 %v145, 0.1
  %v171 = vmul.f32 %v149, 0.1
  %v172 = vmul.f32 %v151, 0.1
  %v173 = vmul.f32 %v155, 0.1
  %v174 = vmul.f32 %v157, 0.1
  %v175 = vmax.f32 %v113, %v159
  %v176 = vmax.f32 %v115, %v160
  %v177 = vmax.f32 %v119, %v161
  %v178 = vmax.f32 %v121, %v162
  %v179 = vmax.f32 %v125, %v163
  %v180 = vmax.f32 %v127, %v164
  %v181 = vmax.f32 %v131, %v165
  %v182 = vmax.f32 %v133, %v166
  %v183 = vmax.f32 %v137, %v167
  %v184 = vmax.f32 %v139, %v168
  %v185 = vmax.f32 %v143, %v169
  %v186 = vmax.f32 %v145, %v170
  %v187 = vmax.f32 %v149, %v171
  %v188 = vmax.f32 %v151, %v172
  %v189 = vmax.f32 %v155, %v173
  %v190 = vmax.f32 %v157, %v174
  %191 = vst [vmem:[%s2] sm:$0xff] %v175
  %vm192 = vcmask 654336
  %193 = vst.msk [vmem:[%s2 + $0x8] sm:$0xff] %vm192, %v176
  %194 = vst [vmem:[%s2 + $0x10] sm:$0xff] %v177
  %195 = vst.msk [vmem:[%s2 + $0x18] sm:$0xff] %vm192, %v178
  %196 = vst [vmem:[%s2 + $0x20] sm:$0xff] %v179
  %197 = vst.msk [vmem:[%s2 + $0x28] sm:$0xff] %vm192, %v180
  %198 = vst [vmem:[%s2 + $0x30] sm:$0xff] %v181
  %199 = vst.msk [vmem:[%s2 + $0x38] sm:$0xff] %vm192, %v182
  %200 = vst [vmem:[%s2 + $0x40] sm:$0xff] %v183
  %201 = vst.msk [vmem:[%s2 + $0x48] sm:$0xff] %vm192, %v184
  %202 = vst [vmem:[%s2 + $0x50] sm:$0xff] %v185
  %203 = vst.msk [vmem:[%s2 + $0x58] sm:$0xff] %vm192, %v186
  %204 = vst [vmem:[%s2 + $0x60] sm:$0xff] %v187
  %205 = vst.msk [vmem:[%s2 + $0x68] sm:$0xff] %vm192, %v188
  %206 = vst [vmem:[%s2 + $0x70] sm:$0x3f] %v189
  %vm207 = vcmask 652288
  %208 = vst.msk [vmem:[%s2 + $0x78] sm:$0x3f] %vm207, %v190
  // Predicated region
  $region10: #{model_forward.1} parent=0 // pred_check
    _
  $region11: #{model_forward.1} parent=0 // pred_check_branch
    %210 = sbr.rel (0) target = $region13
  $region12: #{model_forward.1} parent=0 // pred_region
    _
  $region13: #{model_forward.1} parent=0 // pred_fallthru
    _
  // Predicated region
  $region14: #{model_forward.1} parent=0 // pred_check
    _
  $region15: #{model_forward.1} parent=0 // pred_check_branch
    %212 = sbr.rel (0) target = $region17
  $region16: #{model_forward.1} parent=0 // pred_region
    _
  $region17: #{model_forward.1} parent=0 // pred_fallthru
    _

</llo_original>
